<compile_context>
chip_gen: v5e
topology: v5e:2x2
jax: 0.10.0
libtpu: 0.0.40
codegen_flags: <defaults>
</compile_context>

<pallas_src>
import functools

import jax
import jax.numpy as jnp
from jax.experimental import pallas as pl
from jax.experimental.pallas import tpu as pltpu

_LANE = 128


def _round_up(x, m):
    return ((x + m - 1) // m) * m


def _fcnet_kernel(x_ref, w0_ref, b0_ref, w1_ref, b1_ref, w2_ref, b2_ref,
                  o_ref):
    """Whole MLP in one kernel: (Linear + ReLU) x2 then final Linear.

    x_ref:   (TM, dim)      f32 activations (cast to bf16 here)
    w0_ref:  (dim, idim_p)  bf16, columns zero-padded
    w1_ref:  (idim_p, idim_p) bf16, zero-padded
    w2_ref:  (idim_p, dim)  bf16, rows zero-padded
    b*_ref:  (1, width)     f32 (b0/b1 zero-padded to idim_p, b2 unpadded)
    o_ref:   (TM, dim)      f32 output
    """
    x = x_ref[...].astype(w0_ref.dtype)  # f32 -> bf16 in-kernel (free on VPU)

    # Hidden layer 0: bf16 operands, f32 MXU accumulation.
    h = jnp.dot(x, w0_ref[...], preferred_element_type=jnp.float32)
    h = jnp.maximum(h + b0_ref[...], 0.0)                      # ReLU

    # Hidden layer 1
    h = jnp.dot(h.astype(w1_ref.dtype), w1_ref[...],
                preferred_element_type=jnp.float32)
    h = jnp.maximum(h + b1_ref[...], 0.0)                      # ReLU

    # Output layer (no activation)
    y = jnp.dot(h.astype(w2_ref.dtype), w2_ref[...],
                preferred_element_type=jnp.float32)
    o_ref[...] = (y + b2_ref[...]).astype(o_ref.dtype)


def fcnet_forward(x, params, input_shape, *,
                  compute_dtype=jnp.bfloat16, tm=2048):
    """x: (B, c, w) float32.  params: dict of (in,out) weights + (1,out) biases."""
    c, w = input_shape
    dim = c * w
    idim = params["w0"].shape[1]
    B = x.shape[0]

    # Only the hidden width needs lane-dense padding; dim stays native
    # (block dim == full array dim is legal for any size).
    idim_p = _round_up(idim, _LANE)

    # Activations: reshape only (no cast, no feature pad).  Batch is padded
    # only to a sublane multiple of 8 when necessary (<= 7 extra rows).
    x2d = x.reshape(B, dim)
    B_pad = _round_up(B, 8)
    if B_pad != B:
        x2d = jnp.pad(x2d, ((0, B_pad - B), (0, 0)))

    # Large batch tile; last grid block may be partial (rows are independent).
    TM = min(tm, B_pad)
    grid = (pl.cdiv(B_pad, TM),)

    def pad_w(wm, rows, cols):
        wm = wm.astype(compute_dtype)
        return jnp.pad(wm, ((0, rows - wm.shape[0]), (0, cols - wm.shape[1])))

    def pad_b(bm, cols):
        bm = bm.astype(jnp.float32)
        return jnp.pad(bm, ((0, 0), (0, cols - bm.shape[1])))

    w0p = pad_w(params["w0"], dim, idim_p)      # (dim, idim_p)
    w1p = pad_w(params["w1"], idim_p, idim_p)   # (idim_p, idim_p)
    w2p = pad_w(params["w2"], idim_p, dim)      # (idim_p, dim)
    b0p = pad_b(params["b0"], idim_p)
    b1p = pad_b(params["b1"], idim_p)
    b2p = params["b2"].astype(jnp.float32)      # (1, dim), no pad

    # Weights/biases stay resident in VMEM: same block on every grid step.
    resident = lambda shape: pl.BlockSpec(shape, lambda i: (0, 0))

    w_itemsize = jnp.dtype(compute_dtype).itemsize
    act_itemsize = jnp.dtype(x.dtype).itemsize
    flops = 2 * B_pad * (dim * idim_p + idim_p * idim_p + idim_p * dim)
    bytes_accessed = (
        B_pad * dim * act_itemsize                                # x in
        + (w0p.size + w1p.size + w2p.size) * w_itemsize           # weights
        + (b0p.size + b1p.size + b2p.size) * 4                    # biases
        + B_pad * dim * act_itemsize)                             # y out

    y2d = pl.pallas_call(
        _fcnet_kernel,
        out_shape=jax.ShapeDtypeStruct((B_pad, dim), x.dtype),
        grid_spec=pl.GridSpec(
            grid=grid,
            in_specs=[
                pl.BlockSpec((TM, dim), lambda i: (i, 0)),
                resident(w0p.shape), resident(b0p.shape),
                resident(w1p.shape), resident(b1p.shape),
                resident(w2p.shape), resident(b2p.shape),
            ],
            out_specs=pl.BlockSpec((TM, dim), lambda i: (i, 0)),
        ),
        compiler_params=pltpu.CompilerParams(
            dimension_semantics=("parallel",),
            # Safe on every generation (v5e 16 MiB default, v7x 64 MiB phys).
            vmem_limit_bytes=32 * 1024 * 1024,
        ),
        cost_estimate=pl.CostEstimate(
            flops=flops, transcendentals=0, bytes_accessed=bytes_accessed),
    )(x2d, w0p, b0p, w1p, b1p, w2p, b2p)

    if B_pad != B:
        y2d = y2d[:B]
    return y2d.reshape(B, c, w)


def init_params(key, dim, idim, nhidden=2, dtype=jnp.float32):
    """Deterministic Kaiming-uniform-style init (matches nn.Linear shapes)."""
    params = {}
    dims = [dim] + [idim] * nhidden + [dim]
    keys = jax.random.split(key, 2 * (nhidden + 1))
    for i in range(nhidden + 1):
        fan_in, fan_out = dims[i], dims[i + 1]
        bound = 1.0 / (fan_in ** 0.5)
        w = jax.random.uniform(keys[2 * i], (fan_in, fan_out),
                               minval=-bound, maxval=bound, dtype=dtype)
        b = jax.random.uniform(keys[2 * i + 1], (1, fan_out),
                               minval=-bound, maxval=bound, dtype=dtype)
        params[f"w{i}"] = w
        params[f"b{i}"] = b
    return params


def fcnet_reference(x, params, input_shape):
    """Pure-JAX f32 reference for correctness check."""
    c, w = input_shape
    B = x.shape[0]
    h = x.reshape(B, c * w)
    h = jnp.maximum(h @ params["w0"] + params["b0"], 0.0)
    h = jnp.maximum(h @ params["w1"] + params["b1"], 0.0)
    y = h @ params["w2"] + params["b2"]
    return y.reshape(B, c, w)


if __name__ == "__main__":
    # Small shapes consistent with the module: input_shape=(c, w)=(4, 16),
    # so dim = 64; idim = 32; nhidden = 2; batch = 2.
    input_shape = (4, 16)
    dim = input_shape[0] * input_shape[1]
    idim = 32
    B = 2

    key = jax.random.PRNGKey(0)
    kx, kp = jax.random.split(key)
    x = jax.random.normal(kx, (B,) + input_shape, dtype=jnp.float32)
    params = init_params(kp, dim, idim, nhidden=2)

    y = jax.jit(functools.partial(fcnet_forward, input_shape=input_shape))(
        x, params)
    y = jax.block_until_ready(y)

    y_ref = fcnet_reference(x, params, input_shape)
    assert y.shape == (B,) + input_shape
    # bf16 matmul operands (f32 accumulation) -> relaxed tolerance vs f32 ref.
    assert jnp.allclose(y, y_ref, atol=5e-2, rtol=5e-2), (
        float(jnp.max(jnp.abs(y - y_ref))))

    print("KERNEL_OK")
</pallas_src>

<mosaic_0001>
module attributes {stable_mosaic.version = 11 : i64} {
  func.func @_fcnet_kernel(%arg0: i32, %arg1: memref<8x64xf32, #tpu.memory_space<vmem>>, %arg2: memref<64x128xbf16, #tpu.memory_space<vmem>>, %arg3: memref<1x128xf32, #tpu.memory_space<vmem>>, %arg4: memref<128x128xbf16, #tpu.memory_space<vmem>>, %arg5: memref<1x128xf32, #tpu.memory_space<vmem>>, %arg6: memref<128x64xbf16, #tpu.memory_space<vmem>>, %arg7: memref<1x64xf32, #tpu.memory_space<vmem>>, %arg8: memref<8x64xf32, #tpu.memory_space<vmem>>) attributes {dimension_semantics = [#tpu.dimension_semantics<parallel>], iteration_bounds = array<i64: 1>, scalar_prefetch = 0 : i64, scratch_operands = 0 : i64, tpu.core_type = #tpu.core_type<tc>, window_params = [{transform_indices = @transform_0, window_bounds = array<i64: 8, 64>}, {pipeline_mode = #tpu.pipeline_mode<synchronous>, transform_indices = @transform_1, window_bounds = array<i64: 64, 128>}, {pipeline_mode = #tpu.pipeline_mode<synchronous>, transform_indices = @transform_2, window_bounds = array<i64: 1, 128>}, {pipeline_mode = #tpu.pipeline_mode<synchronous>, transform_indices = @transform_3, window_bounds = array<i64: 128, 128>}, {pipeline_mode = #tpu.pipeline_mode<synchronous>, transform_indices = @transform_4, window_bounds = array<i64: 1, 128>}, {pipeline_mode = #tpu.pipeline_mode<synchronous>, transform_indices = @transform_5, window_bounds = array<i64: 128, 64>}, {pipeline_mode = #tpu.pipeline_mode<synchronous>, transform_indices = @transform_6, window_bounds = array<i64: 1, 64>}, {transform_indices = @transform_7, window_bounds = array<i64: 8, 64>}]} {
    %c0 = arith.constant 0 : index
    %c0_0 = arith.constant 0 : index
    %0 = vector.load %arg1[%c0, %c0_0] : memref<8x64xf32, #tpu.memory_space<vmem>>, vector<8x64xf32>
    %1 = arith.truncf %0 : vector<8x64xf32> to vector<8x64xbf16>
    %c0_1 = arith.constant 0 : index
    %c0_2 = arith.constant 0 : index
    %2 = vector.load %arg2[%c0_1, %c0_2] : memref<64x128xbf16, #tpu.memory_space<vmem>>, vector<64x128xbf16>
    %cst = arith.constant dense<0.000000e+00> : vector<8x128xf32>
    %3 = tpu.matmul %1, %2, %cst {dimension_numbers = #tpu.dot_dimension_numbers<[1], [0], [0], [1], [0, 0, 1, 1], [], []>} : vector<8x64xbf16>, vector<64x128xbf16>, vector<8x128xf32> -> vector<8x128xf32>
    %c0_3 = arith.constant 0 : index
    %c0_4 = arith.constant 0 : index
    %4 = vector.load %arg3[%c0_3, %c0_4] : memref<1x128xf32, #tpu.memory_space<vmem>>, vector<1x128xf32>
    %5 = vector.broadcast %4 : vector<1x128xf32> to vector<8x128xf32>
    %6 = arith.addf %3, %5 : vector<8x128xf32>
    %cst_5 = arith.constant 0.000000e+00 : f32
    %7 = vector.broadcast %cst_5 : f32 to vector<8x128xf32>
    %8 = arith.maximumf %6, %7 : vector<8x128xf32>
    %9 = arith.truncf %8 : vector<8x128xf32> to vector<8x128xbf16>
    %c0_6 = arith.constant 0 : index
    %c0_7 = arith.constant 0 : index
    %10 = vector.load %arg4[%c0_6, %c0_7] : memref<128x128xbf16, #tpu.memory_space<vmem>>, vector<128x128xbf16>
    %cst_8 = arith.constant dense<0.000000e+00> : vector<8x128xf32>
    %11 = tpu.matmul %9, %10, %cst_8 {dimension_numbers = #tpu.dot_dimension_numbers<[1], [0], [0], [1], [0, 0, 1, 1], [], []>} : vector<8x128xbf16>, vector<128x128xbf16>, vector<8x128xf32> -> vector<8x128xf32>
    %c0_9 = arith.constant 0 : index
    %c0_10 = arith.constant 0 : index
    %12 = vector.load %arg5[%c0_9, %c0_10] : memref<1x128xf32, #tpu.memory_space<vmem>>, vector<1x128xf32>
    %13 = vector.broadcast %12 : vector<1x128xf32> to vector<8x128xf32>
    %14 = arith.addf %11, %13 : vector<8x128xf32>
    %cst_11 = arith.constant 0.000000e+00 : f32
    %15 = vector.broadcast %cst_11 : f32 to vector<8x128xf32>
    %16 = arith.maximumf %14, %15 : vector<8x128xf32>
    %17 = arith.truncf %16 : vector<8x128xf32> to vector<8x128xbf16>
    %c0_12 = arith.constant 0 : index
    %c0_13 = arith.constant 0 : index
    %18 = vector.load %arg6[%c0_12, %c0_13] : memref<128x64xbf16, #tpu.memory_space<vmem>>, vector<128x64xbf16>
    %cst_14 = arith.constant dense<0.000000e+00> : vector<8x64xf32>
    %19 = tpu.matmul %17, %18, %cst_14 {dimension_numbers = #tpu.dot_dimension_numbers<[1], [0], [0], [1], [0, 0, 1, 1], [], []>} : vector<8x128xbf16>, vector<128x64xbf16>, vector<8x64xf32> -> vector<8x64xf32>
    %c0_15 = arith.constant 0 : index
    %c0_16 = arith.constant 0 : index
    %20 = vector.load %arg7[%c0_15, %c0_16] : memref<1x64xf32, #tpu.memory_space<vmem>>, vector<1x64xf32>
    %21 = vector.broadcast %20 : vector<1x64xf32> to vector<8x64xf32>
    %22 = arith.addf %19, %21 : vector<8x64xf32>
    %c0_17 = arith.constant 0 : index
    %c0_18 = arith.constant 0 : index
    %23 = vector.load %arg8[%c0_17, %c0_18] : memref<8x64xf32, #tpu.memory_space<vmem>>, vector<8x64xf32>
    tpu.vector_store %arg8[%c0_17, %c0_18], %22 {strides = array<i32>} : memref<8x64xf32, #tpu.memory_space<vmem>>, vector<8x64xf32>,
    return
  }
  func.func @transform_0(%arg0: i32) -> (i32, i32) {
    %c0_i32 = arith.constant 0 : i32
    %c0_i32_0 = arith.constant 0 : i32
    return %arg0, %c0_i32 : i32, i32
  }
  func.func @transform_1(%arg0: i32) -> (i32, i32) {
    %c0_i32 = arith.constant 0 : i32
    %c0_i32_0 = arith.constant 0 : i32
    %c0_i32_1 = arith.constant 0 : i32
    return %c0_i32, %c0_i32_0 : i32, i32
  }
  func.func @transform_2(%arg0: i32) -> (i32, i32) {
    %c0_i32 = arith.constant 0 : i32
    %c0_i32_0 = arith.constant 0 : i32
    %c0_i32_1 = arith.constant 0 : i32
    return %c0_i32, %c0_i32_0 : i32, i32
  }
  func.func @transform_3(%arg0: i32) -> (i32, i32) {
    %c0_i32 = arith.constant 0 : i32
    %c0_i32_0 = arith.constant 0 : i32
    %c0_i32_1 = arith.constant 0 : i32
    return %c0_i32, %c0_i32_0 : i32, i32
  }
  func.func @transform_4(%arg0: i32) -> (i32, i32) {
    %c0_i32 = arith.constant 0 : i32
    %c0_i32_0 = arith.constant 0 : i32
    %c0_i32_1 = arith.constant 0 : i32
    return %c0_i32, %c0_i32_0 : i32, i32
  }
  func.func @transform_5(%arg0: i32) -> (i32, i32) {
    %c0_i32 = arith.constant 0 : i32
    %c0_i32_0 = arith.constant 0 : i32
    %c0_i32_1 = arith.constant 0 : i32
    return %c0_i32, %c0_i32_0 : i32, i32
  }
  func.func @transform_6(%arg0: i32) -> (i32, i32) {
    %c0_i32 = arith.constant 0 : i32
    %c0_i32_0 = arith.constant 0 : i32
    %c0_i32_1 = arith.constant 0 : i32
    return %c0_i32, %c0_i32_0 : i32, i32
  }
  func.func @transform_7(%arg0: i32) -> (i32, i32) {
    %c0_i32 = arith.constant 0 : i32
    %c0_i32_0 = arith.constant 0 : i32
    return %arg0, %c0_i32 : i32, i32
  }
}

</mosaic_0001>

<llo_original>
// kernel: fcnet_forward.1
$region0: #{fcnet_forward.1}
  #allocation0 [shape = 'u32[]', space=smem, size = 0x4, offset = 0x4, fixed_abs, tag = 'smem constant byte address 0x4 - core index']
  #allocation1 [shape = 'u32[72,128]{1,0:T(1,128)}', space=vmem, size = 0x9000, scoped, tag = 'internal scratch']
  %s0 = inlined_call_operand.vmem [shape: f32[8,64], index: 0, kind: input, shape index: {}]
  %s1 = inlined_call_operand.vmem [shape: bf16[64,128], index: 1, kind: input, shape index: {}]
  %s2 = inlined_call_operand.vmem [shape: f32[1,128], index: 2, kind: input, shape index: {}]
  %s3 = inlined_call_operand.vmem [shape: bf16[128,128], index: 3, kind: input, shape index: {}]
  %s4 = inlined_call_operand.vmem [shape: f32[1,128], index: 4, kind: input, shape index: {}]
  %s5 = inlined_call_operand.vmem [shape: bf16[128,64], index: 5, kind: input, shape index: {}]
  %s6 = inlined_call_operand.vmem [shape: f32[1,64], index: 6, kind: input, shape index: {}]
  %s7 = inlined_call_operand.vmem [shape: f32[8,64], index: 7, kind: output, shape index: {}]
  %s8 = sld [smem:[#allocation0]]
  $region38: #{fcnet_forward.1} parent=0
    _
  %s10 = ssub.s32 1, %s8
  %s11 = scalar_select 0, %s10, %s8
  // Predicated region
  $region2: #{fcnet_forward.1} parent=0 // pred_check
    _
  $region3: #{fcnet_forward.1} parent=0 // pred_check_branch
    %13 = sbr.rel (0) target = $region5
  $region4: #{fcnet_forward.1} parent=0 // pred_region
    _
  $region5: #{fcnet_forward.1} parent=0 // pred_fallthru
    _
  // Predicated region
  $region6: #{fcnet_forward.1} parent=0 // pred_check
    _
  $region7: #{fcnet_forward.1} parent=0 // pred_check_branch
    %15 = sbr.rel (0) target = $region9
  $region8: #{fcnet_forward.1} parent=0 // pred_region
    _
  $region9: #{fcnet_forward.1} parent=0 // pred_fallthru
    _
  // Predicated region
  $region10: #{fcnet_forward.1} parent=0 // pred_check
    _
  $region11: #{fcnet_forward.1} parent=0 // pred_check_branch
    %17 = sbr.rel (0) target = $region13
  $region12: #{fcnet_forward.1} parent=0 // pred_region
    _
  $region13: #{fcnet_forward.1} parent=0 // pred_fallthru
    _
  // Predicated region
  $region14: #{fcnet_forward.1} parent=0 // pred_check
    _
  $region15: #{fcnet_forward.1} parent=0 // pred_check_branch
    %19 = sbr.rel (0) target = $region17
  $region16: #{fcnet_forward.1} parent=0 // pred_region
    _
  $region17: #{fcnet_forward.1} parent=0 // pred_fallthru
    _
  // Predicated region
  $region18: #{fcnet_forward.1} parent=0 // pred_check
    _
  $region19: #{fcnet_forward.1} parent=0 // pred_check_branch
    %21 = sbr.rel (0) target = $region21
  $region20: #{fcnet_forward.1} parent=0 // pred_region
    _
  $region21: #{fcnet_forward.1} parent=0 // pred_fallthru
    _
  // Predicated region
  $region22: #{fcnet_forward.1} parent=0 // pred_check
    _
  $region23: #{fcnet_forward.1} parent=0 // pred_check_branch
    %23 = sbr.rel (0) target = $region25
  $region24: #{fcnet_forward.1} parent=0 // pred_region
    _
  $region25: #{fcnet_forward.1} parent=0 // pred_fallthru
    _
  // Predicated region
  $region26: #{fcnet_forward.1} parent=0 // pred_check
    _
  $region27: #{fcnet_forward.1} parent=0 // pred_check_branch
    %25 = sbr.rel (0) target = $region29
  $region28: #{fcnet_forward.1} parent=0 // pred_region
    _
  $region29: #{fcnet_forward.1} parent=0 // pred_fallthru
    _
  %v27 = vld [vmem:[%s0] sm:$0xff]
  %v28 = vpack.c.bf16 %v27, %v27
  %v29 = vld [vmem:[%s1] sm:$0xf]
  %v30 = vld [vmem:[%s1 + $0x4] sm:$0xf]
  %v31 = vld [vmem:[%s1 + $0x8] sm:$0xf]
  %v32 = vld [vmem:[%s1 + $0xc] sm:$0xf]
  %v33 = vld [vmem:[%s1 + $0x10] sm:$0xf]
  %v34 = vld [vmem:[%s1 + $0x14] sm:$0xf]
  %v35 = vld [vmem:[%s1 + $0x18] sm:$0xf]
  %v36 = vld [vmem:[%s1 + $0x1c] sm:$0xf]
  %v37 = vld [vmem:[%s2] sm:$0x1]
  %v39 = vperm.slane %v37, 0
  %v49 = vunpack.c.l.b16 %v29
  %v50 = vunpack.c.l.b16 %v30
  %v51 = vunpack.c.l.b16 %v31
  %v52 = vunpack.c.l.b16 %v32
  %v53 = vunpack.c.l.b16 %v33
  %v54 = vunpack.c.l.b16 %v34
  %v55 = vunpack.c.l.b16 %v35
  %v56 = vunpack.c.l.b16 %v36
  %v57 = vpack.c.b16 %v50, %v49
  %v58 = vpack.c.b16 %v52, %v51
  %v59 = vpack.c.b16 %v54, %v53
  %v60 = vpack.c.b16 %v56, %v55
  %vm65 = vcmask 523264
  %v67 = vsel %vm65, %v28, 0
  %69 = vmatpush.bf16.msra.mxu0 0
  %70 = vmatpush.bf16.msra.mxu0 0
  %71 = vmatpush.bf16.msra.mxu0 0
  %72 = vmatpush.bf16.msra.mxu0 0
  %73 = vmatpush.bf16.msra.mxu0 %v60
  %74 = vmatpush.bf16.msra.mxu0 %v59
  %75 = vmatpush.bf16.msra.mxu0 %v58
  %76 = vmatpush.bf16.msra.mxu0 %v57
  %77 = vmatmul.bf16.gmra.mxu0 %v67
  %v78 = vpop.f32.mrf.mxu0
  %v79 = vadd.f32 %v39, %v78
  %v80 = vpop.f32.mrf.mxu0
  %81 = vdwg.mxu0
  %v82 = vmax.f32 %v79, 0.0
  %v83 = vpack.c.bf16 %v82, %v82
  %v84 = vld [vmem:[%s3] sm:$0xf]
  %v85 = vld [vmem:[%s3 + $0x4] sm:$0xf]
  %v86 = vld [vmem:[%s3 + $0x8] sm:$0xf]
  %v87 = vld [vmem:[%s3 + $0xc] sm:$0xf]
  %v88 = vld [vmem:[%s3 + $0x10] sm:$0xf]
  %v89 = vld [vmem:[%s3 + $0x14] sm:$0xf]
  %v90 = vld [vmem:[%s3 + $0x18] sm:$0xf]
  %v91 = vld [vmem:[%s3 + $0x1c] sm:$0xf]
  %v92 = vld [vmem:[%s3 + $0x20] sm:$0xf]
  %v93 = vld [vmem:[%s3 + $0x24] sm:$0xf]
  %v94 = vld [vmem:[%s3 + $0x28] sm:$0xf]
  %v95 = vld [vmem:[%s3 + $0x2c] sm:$0xf]
  %v96 = vld [vmem:[%s3 + $0x30] sm:$0xf]
  %v97 = vld [vmem:[%s3 + $0x34] sm:$0xf]
  %v98 = vld [vmem:[%s3 + $0x38] sm:$0xf]
  %v99 = vld [vmem:[%s3 + $0x3c] sm:$0xf]
  %v100 = vld [vmem:[%s4] sm:$0x1]
  %v102 = vperm.slane %v100, 0
  %v120 = vunpack.c.l.b16 %v84
  %v121 = vunpack.c.l.b16 %v85
  %v122 = vunpack.c.l.b16 %v86
  %v123 = vunpack.c.l.b16 %v87
  %v124 = vunpack.c.l.b16 %v88
  %v125 = vunpack.c.l.b16 %v89
  %v126 = vunpack.c.l.b16 %v90
  %v127 = vunpack.c.l.b16 %v91
  %v128 = vunpack.c.l.b16 %v92
  %v129 = vunpack.c.l.b16 %v93
  %v130 = vunpack.c.l.b16 %v94
  %v131 = vunpack.c.l.b16 %v95
  %v132 = vunpack.c.l.b16 %v96
  %v133 = vunpack.c.l.b16 %v97
  %v134 = vunpack.c.l.b16 %v98
  %v135 = vunpack.c.l.b16 %v99
  %v136 = vpack.c.b16 %v121, %v120
  %v137 = vpack.c.b16 %v123, %v122
  %v138 = vpack.c.b16 %v125, %v124
  %v139 = vpack.c.b16 %v127, %v126
  %v140 = vpack.c.b16 %v129, %v128
  %v141 = vpack.c.b16 %v131, %v130
  %v142 = vpack.c.b16 %v133, %v132
  %v143 = vpack.c.b16 %v135, %v134
  %152 = vmatpush.bf16.msra.mxu0 %v143
  %153 = vmatpush.bf16.msra.mxu0 %v142
  %154 = vmatpush.bf16.msra.mxu0 %v141
  %155 = vmatpush.bf16.msra.mxu0 %v140
  %156 = vmatpush.bf16.msra.mxu0 %v139
  %157 = vmatpush.bf16.msra.mxu0 %v138
  %158 = vmatpush.bf16.msra.mxu0 %v137
  %159 = vmatpush.bf16.msra.mxu0 %v136
  %160 = vmatmul.bf16.gmra.mxu0 %v83
  %v161 = vpop.f32.mrf.mxu0
  %v162 = vadd.f32 %v102, %v161
  %v163 = vpop.f32.mrf.mxu0
  %164 = vdwg.mxu0
  %v165 = vmax.f32 %v162, 0.0
  %v166 = vpack.c.bf16 %v165, %v165
  %v167 = vld [vmem:[%s5] sm:$0xf]
  %v168 = vld [vmem:[%s5 + $0x4] sm:$0xf]
  %v169 = vld [vmem:[%s5 + $0x8] sm:$0xf]
  %v170 = vld [vmem:[%s5 + $0xc] sm:$0xf]
  %v171 = vld [vmem:[%s5 + $0x10] sm:$0xf]
  %v172 = vld [vmem:[%s5 + $0x14] sm:$0xf]
  %v173 = vld [vmem:[%s5 + $0x18] sm:$0xf]
  %v174 = vld [vmem:[%s5 + $0x1c] sm:$0xf]
  %v175 = vld [vmem:[%s5 + $0x20] sm:$0xf]
  %v176 = vld [vmem:[%s5 + $0x24] sm:$0xf]
  %v177 = vld [vmem:[%s5 + $0x28] sm:$0xf]
  %v178 = vld [vmem:[%s5 + $0x2c] sm:$0xf]
  %v179 = vld [vmem:[%s5 + $0x30] sm:$0xf]
  %v180 = vld [vmem:[%s5 + $0x34] sm:$0xf]
  %v181 = vld [vmem:[%s5 + $0x38] sm:$0xf]
  %v182 = vld [vmem:[%s5 + $0x3c] sm:$0xf]
  %v183 = vld [vmem:[%s6] sm:$0x1]
  %v185 = vperm.slane %v183, 0
  %v203 = vunpack.c.l.b16 %v167
  %v204 = vunpack.c.l.b16 %v168
  %v205 = vunpack.c.l.b16 %v169
  %v206 = vunpack.c.l.b16 %v170
  %v207 = vunpack.c.l.b16 %v171
  %v208 = vunpack.c.l.b16 %v172
  %v209 = vunpack.c.l.b16 %v173
  %v210 = vunpack.c.l.b16 %v174
  %v211 = vunpack.c.l.b16 %v175
  %v212 = vunpack.c.l.b16 %v176
  %v213 = vunpack.c.l.b16 %v177
  %v214 = vunpack.c.l.b16 %v178
  %v215 = vunpack.c.l.b16 %v179
  %v216 = vunpack.c.l.b16 %v180
  %v217 = vunpack.c.l.b16 %v181
  %v218 = vunpack.c.l.b16 %v182
  %v219 = vpack.c.b16 %v204, %v203
  %v220 = vpack.c.b16 %v206, %v205
  %v221 = vpack.c.b16 %v208, %v207
  %v222 = vpack.c.b16 %v210, %v209
  %v223 = vpack.c.b16 %v212, %v211
  %v224 = vpack.c.b16 %v214, %v213
  %v225 = vpack.c.b16 %v216, %v215
  %v226 = vpack.c.b16 %v218, %v217
  %235 = vmatpush.bf16.msra.mxu0 %v226
  %236 = vmatpush.bf16.msra.mxu0 %v225
  %237 = vmatpush.bf16.msra.mxu0 %v224
  %238 = vmatpush.bf16.msra.mxu0 %v223
  %239 = vmatpush.bf16.msra.mxu0 %v222
  %240 = vmatpush.bf16.msra.mxu0 %v221
  %241 = vmatpush.bf16.msra.mxu0 %v220
  %242 = vmatpush.bf16.msra.mxu0 %v219
  %243 = vmatmul.bf16.gmra.mxu0 %v166
  %v244 = vpop.f32.mrf.mxu0
  %v245 = vadd.f32 %v185, %v244
  %v246 = vpop.f32.mrf.mxu0
  %247 = vdwg.mxu0
  %248 = vst.msk [vmem:[%s7] sm:$0xff] %vm65, %v245
  // Predicated region
  $region30: #{fcnet_forward.1} parent=0 // pred_check
    _
  $region31: #{fcnet_forward.1} parent=0 // pred_check_branch
    %250 = sbr.rel (0) target = $region33
  $region32: #{fcnet_forward.1} parent=0 // pred_region
    _
  $region33: #{fcnet_forward.1} parent=0 // pred_fallthru
    _
  // Predicated region
  $region34: #{fcnet_forward.1} parent=0 // pred_check
    _
  $region35: #{fcnet_forward.1} parent=0 // pred_check_branch
    %252 = sbr.rel (0) target = $region37
  $region36: #{fcnet_forward.1} parent=0 // pred_region
    _
  $region37: #{fcnet_forward.1} parent=0 // pred_fallthru
    _

</llo_original>
